<compile_context>
chip_gen: v7x
topology: tpu7x:2x2x1
jax: 0.10.0
libtpu: 0.0.40
codegen_flags: <defaults>
</compile_context>

<pallas_src>
import jax
import jax.numpy as jnp
from jax.experimental import pallas as pl
from jax.experimental.pallas import tpu as pltpu


def _round_up(n, m):
    return ((n + m - 1) // m) * m


def leaf_centerer_kernel(x_ref, w_in_ref, b_in_ref, w2_ref, o_ref):
    H = w2_ref.shape[0]

    x = x_ref[...]                                   # native dtype -> MXU
    # Fused mlp1 + skip matmul:
    #   z[:, :H] = x @ w1 + b1
    #   z[:, H:] = x @ w_skip + b_skip + b2          (b2 folded into bias)
    z = jnp.dot(x, w_in_ref[...], preferred_element_type=jnp.float32) + b_in_ref[...]

    h_pre = z[:, :H]                                 # (tb, H)  f32
    s = z[:, H:]                                     # (tb, 3)  f32

    # leaky_relu, slope 0.01 (PyTorch default), single VALU op in f32
    h = jnp.maximum(h_pre, 0.01 * h_pre)

    # mlp2 (bias already folded into s); keep MXU in the weights' native dtype
    y = jnp.dot(h.astype(w2_ref.dtype), w2_ref[...],
                preferred_element_type=jnp.float32)

    o_ref[...] = jnp.tanh(s + y).astype(o_ref.dtype)


def leaf_centerer(x, w_skip, b_skip, w1, b1, w2, b2, *, tile_b=8192):
    """x: (B, F). Weights stored transposed as (in, out); biases as (1, out)."""
    B, F = x.shape
    H = w1.shape[1]

    # Effective batch tile: multiple of 8, capped so the double-buffered x
    # block stays around a few MiB of VMEM, and no larger than the batch needs.
    bytes_per_row = max(F * x.dtype.itemsize, 1)
    tb_vmem_cap = max(8, ((4 << 20) // bytes_per_row) // 8 * 8)  # ~4 MiB x tile
    tb = min(tile_b, tb_vmem_cap, _round_up(B, 8))
    tb = _round_up(tb, 8)
    B_pad = pl.cdiv(B, tb) * tb
    x_p = x if B_pad == B else jnp.pad(x, ((0, B_pad - B), (0, 0)))

    # Fuse mlp1 and skip on the N axis; fold b2 into the skip-lane bias.
    w_in = jnp.concatenate([w1, w_skip], axis=1).astype(x.dtype)           # (F, H+3)
    b_in = jnp.concatenate([b1, b_skip + b2], axis=1).astype(jnp.float32)  # (1, H+3)
    w2c = w2.astype(x.dtype)                                               # (H, 3)

    grid = (B_pad // tb,)

    # Parameter blocks are the full (small) arrays with a constant index_map,
    # so they are not re-DMA'd per grid step.
    full = lambda shape: pl.BlockSpec(shape, lambda i: (0, 0))

    itemsize = x_p.dtype.itemsize
    cost = pl.CostEstimate(
        flops=2 * B_pad * F * (H + 3) + 2 * B_pad * H * 3,
        transcendentals=B_pad * 3,
        bytes_accessed=(B_pad * F * itemsize                     # x read
                        + w_in.size * w_in.dtype.itemsize
                        + b_in.size * 4
                        + w2c.size * w2c.dtype.itemsize
                        + B_pad * 3 * itemsize),                 # out write
    )

    out = pl.pallas_call(
        leaf_centerer_kernel,
        out_shape=jax.ShapeDtypeStruct((B_pad, 3), x.dtype),
        grid_spec=pltpu.PrefetchScalarGridSpec(
            num_scalar_prefetch=0,
            grid=grid,
            in_specs=[
                pl.BlockSpec((tb, F), lambda i: (i, 0)),   # x tile
                full((F, H + 3)),                          # fused [w1 | w_skip]
                full((1, H + 3)),                          # fused [b1 | b_skip + b2]
                full((H, 3)),                              # mlp2.weight^T
            ],
            out_specs=pl.BlockSpec((tb, 3), lambda i: (i, 0)),
        ),
        compiler_params=pltpu.CompilerParams(
            dimension_semantics=("parallel",)),
        cost_estimate=cost,
    )(x_p, w_in, b_in, w2c)

    return out[:B]


def _init_linear(key, fan_in, fan_out):
    """Deterministic init mimicking nn.Linear (uniform(-1/sqrt(fan_in), +))."""
    kw, kb = jax.random.split(key)
    bound = 1.0 / jnp.sqrt(fan_in)
    # stored as (in, out) == PyTorch weight (out, in) transposed
    w = jax.random.uniform(kw, (fan_in, fan_out), jnp.float32, -bound, bound)
    b = jax.random.uniform(kb, (1, fan_out), jnp.float32, -bound, bound)
    return w, b


def reference(x, w_skip, b_skip, w1, b1, w2, b2):
    h = x @ w1 + b1
    h = jnp.where(h > 0, h, 0.01 * h)
    return jnp.tanh((x @ w_skip + b_skip) + (h @ w2 + b2))


if __name__ == "__main__":
    feature_size = 32
    hidden_size = 32
    batch = 16

    key = jax.random.PRNGKey(0)
    kx, ks, k1, k2 = jax.random.split(key, 4)

    x = jax.random.normal(kx, (batch, feature_size), jnp.float32)
    w_skip, b_skip = _init_linear(ks, feature_size, 3)
    w1, b1 = _init_linear(k1, feature_size, hidden_size)
    w2, b2 = _init_linear(k2, hidden_size, 3)

    ref = reference(x, w_skip, b_skip, w1, b1, w2, b2)

    # f32 path
    out = jax.block_until_ready(leaf_centerer(x, w_skip, b_skip, w1, b1, w2, b2))
    assert out.shape == (batch, 3)
    assert jnp.allclose(out, ref, atol=1e-5, rtol=1e-5), "f32 mismatch vs reference"

    # bf16 input/weight path (recommended on v6e/v7x: halves the HBM read stream)
    out_bf16 = jax.block_until_ready(
        leaf_centerer(x.astype(jnp.bfloat16), w_skip, b_skip, w1, b1, w2, b2))
    assert out_bf16.shape == (batch, 3)
    assert jnp.allclose(out_bf16.astype(jnp.float32), ref, atol=3e-2, rtol=3e-2), \
        "bf16 mismatch vs reference"

    # batch not a multiple of 8: exercises the padding / cdiv path
    x_odd = jax.random.normal(kx, (batch + 5, feature_size), jnp.float32)
    ref_odd = reference(x_odd, w_skip, b_skip, w1, b1, w2, b2)
    out_odd = jax.block_until_ready(
        leaf_centerer(x_odd, w_skip, b_skip, w1, b1, w2, b2))
    assert out_odd.shape == (batch + 5, 3)
    assert jnp.allclose(out_odd, ref_odd, atol=1e-5, rtol=1e-5), "padded-batch mismatch"

    print("KERNEL_OK")
</pallas_src>

<mosaic_0001>
module attributes {stable_mosaic.version = 11 : i64} {
  func.func @leaf_centerer_kernel(%arg0: i32, %arg1: memref<16x32xf32, #tpu.memory_space<vmem>>, %arg2: memref<32x35xf32, #tpu.memory_space<vmem>>, %arg3: memref<1x35xf32, #tpu.memory_space<vmem>>, %arg4: memref<32x3xf32, #tpu.memory_space<vmem>>, %arg5: memref<16x3xf32, #tpu.memory_space<vmem>>) attributes {dimension_semantics = [#tpu.dimension_semantics<parallel>], iteration_bounds = array<i64: 1>, scalar_prefetch = 0 : i64, scratch_operands = 0 : i64, tpu.core_type = #tpu.core_type<tc>, window_params = [{transform_indices = @transform_0, window_bounds = array<i64: 16, 32>}, {pipeline_mode = #tpu.pipeline_mode<synchronous>, transform_indices = @transform_1, window_bounds = array<i64: 32, 35>}, {pipeline_mode = #tpu.pipeline_mode<synchronous>, transform_indices = @transform_2, window_bounds = array<i64: 1, 35>}, {pipeline_mode = #tpu.pipeline_mode<synchronous>, transform_indices = @transform_3, window_bounds = array<i64: 32, 3>}, {transform_indices = @transform_4, window_bounds = array<i64: 16, 3>}]} {
    %c0 = arith.constant 0 : index
    %c0_0 = arith.constant 0 : index
    %0 = vector.load %arg1[%c0, %c0_0] : memref<16x32xf32, #tpu.memory_space<vmem>>, vector<16x32xf32>
    %c0_1 = arith.constant 0 : index
    %c0_2 = arith.constant 0 : index
    %1 = vector.load %arg2[%c0_1, %c0_2] : memref<32x35xf32, #tpu.memory_space<vmem>>, vector<32x35xf32>
    %cst = arith.constant dense<0.000000e+00> : vector<16x35xf32>
    %2 = tpu.matmul %0, %1, %cst {dimension_numbers = #tpu.dot_dimension_numbers<[1], [0], [0], [1], [0, 0, 1, 1], [], []>} : vector<16x32xf32>, vector<32x35xf32>, vector<16x35xf32> -> vector<16x35xf32>
    %c0_3 = arith.constant 0 : index
    %c0_4 = arith.constant 0 : index
    %3 = vector.load %arg3[%c0_3, %c0_4] : memref<1x35xf32, #tpu.memory_space<vmem>>, vector<1x35xf32>
    %4 = vector.broadcast %3 : vector<1x35xf32> to vector<16x35xf32>
    %5 = arith.addf %2, %4 : vector<16x35xf32>
    %6 = vector.extract_strided_slice %5 {offsets = [0, 0], sizes = [16, 32], strides = [1, 1]} : vector<16x35xf32> to vector<16x32xf32>
    %7 = vector.extract_strided_slice %5 {offsets = [0, 32], sizes = [16, 3], strides = [1, 1]} : vector<16x35xf32> to vector<16x3xf32>
    %cst_5 = arith.constant 0.00999999977 : f32
    %8 = vector.broadcast %cst_5 : f32 to vector<16x32xf32>
    %9 = arith.mulf %8, %6 : vector<16x32xf32>
    %10 = arith.maximumf %6, %9 : vector<16x32xf32>
    %c0_6 = arith.constant 0 : index
    %c0_7 = arith.constant 0 : index
    %11 = vector.load %arg4[%c0_6, %c0_7] : memref<32x3xf32, #tpu.memory_space<vmem>>, vector<32x3xf32>
    %cst_8 = arith.constant dense<0.000000e+00> : vector<16x3xf32>
    %12 = tpu.matmul %10, %11, %cst_8 {dimension_numbers = #tpu.dot_dimension_numbers<[1], [0], [0], [1], [0, 0, 1, 1], [], []>} : vector<16x32xf32>, vector<32x3xf32>, vector<16x3xf32> -> vector<16x3xf32>
    %13 = arith.addf %7, %12 : vector<16x3xf32>
    %14 = math.tanh %13 : vector<16x3xf32>
    %c0_9 = arith.constant 0 : index
    %c0_10 = arith.constant 0 : index
    %15 = vector.load %arg5[%c0_9, %c0_10] : memref<16x3xf32, #tpu.memory_space<vmem>>, vector<16x3xf32>
    tpu.vector_store %arg5[%c0_9, %c0_10], %14 {strides = array<i32>} : memref<16x3xf32, #tpu.memory_space<vmem>>, vector<16x3xf32>,
    return
  }
  func.func @transform_0(%arg0: i32) -> (i32, i32) {
    %c0_i32 = arith.constant 0 : i32
    %c0_i32_0 = arith.constant 0 : i32
    return %arg0, %c0_i32 : i32, i32
  }
  func.func @transform_1(%arg0: i32) -> (i32, i32) {
    %c0_i32 = arith.constant 0 : i32
    %c0_i32_0 = arith.constant 0 : i32
    %c0_i32_1 = arith.constant 0 : i32
    return %c0_i32, %c0_i32_0 : i32, i32
  }
  func.func @transform_2(%arg0: i32) -> (i32, i32) {
    %c0_i32 = arith.constant 0 : i32
    %c0_i32_0 = arith.constant 0 : i32
    %c0_i32_1 = arith.constant 0 : i32
    return %c0_i32, %c0_i32_0 : i32, i32
  }
  func.func @transform_3(%arg0: i32) -> (i32, i32) {
    %c0_i32 = arith.constant 0 : i32
    %c0_i32_0 = arith.constant 0 : i32
    %c0_i32_1 = arith.constant 0 : i32
    return %c0_i32, %c0_i32_0 : i32, i32
  }
  func.func @transform_4(%arg0: i32) -> (i32, i32) {
    %c0_i32 = arith.constant 0 : i32
    %c0_i32_0 = arith.constant 0 : i32
    return %arg0, %c0_i32 : i32, i32
  }
}

</mosaic_0001>

<llo_original>
// kernel: tpu_custom_call.1
$region0: #{tpu_custom_call.1}
  #allocation0 [shape = 'u32[]', space=smem, size = 0x4, offset = 0x4, fixed_abs, tag = 'smem constant byte address 0x4 - core index']
  #allocation1 [shape = 'u32[144,128]{1,0:T(1,128)}', space=vmem, size = 0x12000, scoped, tag = 'internal scratch']
  %s0 = inlined_call_operand.hbm [shape: f32[16,32], index: 0, kind: input, shape index: {}]
  %s1 = inlined_call_operand.vmem [shape: f32[32,35], index: 1, kind: input, shape index: {}]
  %s2 = inlined_call_operand.vmem [shape: f32[1,35], index: 2, kind: input, shape index: {}]
  %s3 = inlined_call_operand.vmem [shape: f32[32,3], index: 3, kind: input, shape index: {}]
  %s4 = inlined_call_operand.vmem [shape: f32[16,3], index: 4, kind: output, shape index: {}]
  %s5 = sld [smem:[#allocation0]]
  $region30: #{tpu_custom_call.1} parent=0
    _
  %s7 = ssub.s32 1, %s5
  %s8 = scalar_select 0, %s7, %s5
  $region1: #{tpu_custom_call.1} parent=0
    #allocation2 [shape = 'u8[8192]{0}', space=vmem, size = 0x2000, scoped, tag = 'input window, operand 0, single buffered']
    #allocation3 [shape = 's32[1]{0}', space=sflag, size = 0x4, scoped, tag = 'scoped memory for tpu_custom_call.1']
    %9 = vsyncpa [#allocation3], 0
    // Predicated region
    $region2: #{tpu_custom_call.1} parent=1 // pred_check
      _
    $region3: #{tpu_custom_call.1} parent=1 // pred_check_branch
      %11 = sbr.rel (0) target = $region5
    $region4: #{tpu_custom_call.1} parent=1 // pred_region
      %s13 = ssub.s32 256, 256
      %14 = vsyncadd [#allocation3], %s13
      %s15 = sshll.u32 [#allocation2], 4
      %s16 = int_to_ptr.vmem [resolvable:$true] %s15
      %21 = dma.hbm_to_vmem [thread:$0]  %s0, 256, %s16, [#allocation3], 128, 128, 8
    $region5: #{tpu_custom_call.1} parent=1 // pred_fallthru
      _
    // Predicated region
    $region6: #{tpu_custom_call.1} parent=1 // pred_check
      _
    $region7: #{tpu_custom_call.1} parent=1 // pred_check_branch
      %23 = sbr.rel (0) target = $region9
    $region8: #{tpu_custom_call.1} parent=1 // pred_region
      _
    $region9: #{tpu_custom_call.1} parent=1 // pred_fallthru
      _
    // Predicated region
    $region10: #{tpu_custom_call.1} parent=1 // pred_check
      _
    $region11: #{tpu_custom_call.1} parent=1 // pred_check_branch
      %25 = sbr.rel (0) target = $region13
    $region12: #{tpu_custom_call.1} parent=1 // pred_region
      _
    $region13: #{tpu_custom_call.1} parent=1 // pred_fallthru
      _
    // Predicated region
    $region14: #{tpu_custom_call.1} parent=1 // pred_check
      _
    $region15: #{tpu_custom_call.1} parent=1 // pred_check_branch
      %27 = sbr.rel (0) target = $region17
    $region16: #{tpu_custom_call.1} parent=1 // pred_region
      _
    $region17: #{tpu_custom_call.1} parent=1 // pred_fallthru
      _
    // Predicated region
    $region18: #{tpu_custom_call.1} parent=1 // pred_check
      _
    $region19: #{tpu_custom_call.1} parent=1 // pred_check_branch
      %29 = sbr.rel (0) target = $region21
    $region20: #{tpu_custom_call.1} parent=1 // pred_region
      %30 = dma.done [#allocation3], 256
    $region21: #{tpu_custom_call.1} parent=1 // pred_fallthru
      _
    %v31 = vld [vmem:[#allocation2] sm:$0xff]
    %v32 = vld [vmem:[#allocation2 + $0x8] sm:$0xff]
    %v33 = vld [vmem:[%s1] sm:$0xff]
    %v34 = vld [vmem:[%s1 + $0x8] sm:$0xff]
    %v35 = vld [vmem:[%s1 + $0x10] sm:$0xff]
    %v36 = vld [vmem:[%s1 + $0x18] sm:$0xff]
    %v37 = vld [vmem:[%s2] sm:$0x1]
    %v39 = vlaneseq
    %v40 = vshrl.u32 %v39, 7
    %v41 = vsub.s32 0, %v40
    %v42 = vrot.slane %v37, %v41
    %vm44 = vcmask 261120
    %v46 = vsel %vm44, %v31, 0
    %v49 = vsel %vm44, %v32, 0
    %51 = vmatprep.subr.mxu0 0.0
    %52 = vmatpush1.msra.mxu0 %v33
    %53 = vmatprep.subr.mxu0 0.0
    %54 = vmatpush1.msra.mxu0 %v34
    %55 = vmatprep.subr.mxu0 0.0
    %56 = vmatpush1.msra.mxu0 %v35
    %57 = vmatprep.subr.mxu0 0.0
    %58 = vmatpush1.msra.mxu0 %v36
    %59 = vmatprep.subr.mxu0 0.0
    %60 = vmatpush1.msra.mxu0 0.0
    %61 = vmatprep.subr.mxu0 0.0
    %62 = vmatpush1.msra.mxu0 0.0
    %63 = vmatprep.subr.mxu0 0.0
    %64 = vmatpush1.msra.mxu0 0.0
    %65 = vmatprep.subr.mxu0 0.0
    %66 = vmatpush1.msra.mxu0 0.0
    %67 = vmatprep.subr.mxu0 0.0
    %68 = vmatpush1.msra.mxu0 0.0
    %69 = vmatprep.subr.mxu0 0.0
    %70 = vmatpush1.msra.mxu0 0.0
    %71 = vmatprep.subr.mxu0 0.0
    %72 = vmatpush1.msra.mxu0 0.0
    %73 = vmatprep.subr.mxu0 0.0
    %74 = vmatpush1.msra.mxu0 0.0
    %75 = vmatprep.subr.mxu0 0.0
    %76 = vmatpush1.msra.mxu0 0.0
    %77 = vmatprep.subr.mxu0 0.0
    %78 = vmatpush1.msra.mxu0 0.0
    %79 = vmatprep.subr.mxu0 0.0
    %80 = vmatpush1.msra.mxu0 0.0
    %81 = vmatprep.subr.mxu0 0.0
    %82 = vmatpush1.msra.mxu0 0.0
    %83 = vmatprep.subr.mxu0 0.0
    %84 = vmatpush1.msra.mxu0 0.0
    %85 = vmatprep.subr.mxu0 0.0
    %86 = vmatpush1.msra.mxu0 0.0
    %87 = vmatprep.subr.mxu0 0.0
    %88 = vmatpush1.msra.mxu0 0.0
    %89 = vmatprep.subr.mxu0 0.0
    %90 = vmatpush1.msra.mxu0 0.0
    %91 = vmatprep.subr.mxu0 0.0
    %92 = vmatpush1.msra.mxu0 0.0
    %93 = vmatprep.subr.mxu0 0.0
    %94 = vmatpush1.msra.mxu0 0.0
    %95 = vmatprep.subr.mxu0 0.0
    %96 = vmatpush1.msra.mxu0 0.0
    %97 = vmatprep.subr.mxu0 0.0
    %98 = vmatpush1.msra.mxu0 0.0
    %99 = vmatprep.subr.mxu0 0.0
    %100 = vmatpush1.msra.mxu0 0.0
    %101 = vmatprep.subr.mxu0 0.0
    %102 = vmatpush1.msra.mxu0 0.0
    %103 = vmatprep.subr.mxu0 0.0
    %104 = vmatpush1.msra.mxu0 0.0
    %105 = vmatprep.subr.mxu0 0.0
    %106 = vmatpush1.msra.mxu0 0.0
    %107 = vmatprep.subr.mxu0 0.0
    %108 = vmatpush1.msra.mxu0 0.0
    %109 = vmatprep.subr.mxu0 0.0
    %110 = vmatpush1.msra.mxu0 0.0
    %111 = vmatprep.subr.mxu0 0.0
    %112 = vmatpush1.msra.mxu0 0.0
    %113 = vmatprep.subr.mxu0 0.0
    %114 = vmatpush1.msra.mxu0 0.0
    %115 = vmatprep.mubr.f32.mxu0 0.0
    %116 = vmatmul.mubr.f32.gmra.mrb[0].mxu0 %v46
    %v117 = vpop.f32.mrb[0].mxu0
    %v118 = vadd.f32 %v42, %v117
    %v119 = vpop.f32.mrb[0].mxu0
    %120 = vmatprep.mubr.f32.mxu0 0.0
    %121 = vmatmul.mubr.f32.gmra.mrb[0].mxu0 %v49
    %v122 = vpop.f32.mrb[0].mxu0
    %v123 = vadd.f32 %v42, %v122
    %v124 = vpop.f32.mrb[0].mxu0
    %125 = vdwg.mxu0
    %v126 = vmul.f32 %v118, 0.01
    %v127 = vmul.f32 %v123, 0.01
    %v128 = vmax.f32 %v118, %v126
    %v129 = vmax.f32 %v123, %v127
    %v130 = vld [vmem:[%s3] sm:$0xff]
    %v131 = vld [vmem:[%s3 + $0x8] sm:$0xff]
    %v132 = vld [vmem:[%s3 + $0x10] sm:$0xff]
    %v133 = vld [vmem:[%s3 + $0x18] sm:$0xff]
    %v135 = vsel %vm44, %v128, 0
    %v138 = vsel %vm44, %v129, 0
    %140 = vmatprep.subr.mxu0 0.0
    %141 = vmatpush1.msra.mxu0 %v130
    %142 = vmatprep.subr.mxu0 0.0
    %143 = vmatpush1.msra.mxu0 %v131
    %144 = vmatprep.subr.mxu0 0.0
    %145 = vmatpush1.msra.mxu0 %v132
    %146 = vmatprep.subr.mxu0 0.0
    %147 = vmatpush1.msra.mxu0 %v133
    %148 = vmatprep.subr.mxu0 0.0
    %149 = vmatpush1.msra.mxu0 0.0
    %150 = vmatprep.subr.mxu0 0.0
    %151 = vmatpush1.msra.mxu0 0.0
    %152 = vmatprep.subr.mxu0 0.0
    %153 = vmatpush1.msra.mxu0 0.0
    %154 = vmatprep.subr.mxu0 0.0
    %155 = vmatpush1.msra.mxu0 0.0
    %156 = vmatprep.subr.mxu0 0.0
    %157 = vmatpush1.msra.mxu0 0.0
    %158 = vmatprep.subr.mxu0 0.0
    %159 = vmatpush1.msra.mxu0 0.0
    %160 = vmatprep.subr.mxu0 0.0
    %161 = vmatpush1.msra.mxu0 0.0
    %162 = vmatprep.subr.mxu0 0.0
    %163 = vmatpush1.msra.mxu0 0.0
    %164 = vmatprep.subr.mxu0 0.0
    %165 = vmatpush1.msra.mxu0 0.0
    %166 = vmatprep.subr.mxu0 0.0
    %167 = vmatpush1.msra.mxu0 0.0
    %168 = vmatprep.subr.mxu0 0.0
    %169 = vmatpush1.msra.mxu0 0.0
    %170 = vmatprep.subr.mxu0 0.0
    %171 = vmatpush1.msra.mxu0 0.0
    %172 = vmatprep.subr.mxu0 0.0
    %173 = vmatpush1.msra.mxu0 0.0
    %174 = vmatprep.subr.mxu0 0.0
    %175 = vmatpush1.msra.mxu0 0.0
    %176 = vmatprep.subr.mxu0 0.0
    %177 = vmatpush1.msra.mxu0 0.0
    %178 = vmatprep.subr.mxu0 0.0
    %179 = vmatpush1.msra.mxu0 0.0
    %180 = vmatprep.subr.mxu0 0.0
    %181 = vmatpush1.msra.mxu0 0.0
    %182 = vmatprep.subr.mxu0 0.0
    %183 = vmatpush1.msra.mxu0 0.0
    %184 = vmatprep.subr.mxu0 0.0
    %185 = vmatpush1.msra.mxu0 0.0
    %186 = vmatprep.subr.mxu0 0.0
    %187 = vmatpush1.msra.mxu0 0.0
    %188 = vmatprep.subr.mxu0 0.0
    %189 = vmatpush1.msra.mxu0 0.0
    %190 = vmatprep.subr.mxu0 0.0
    %191 = vmatpush1.msra.mxu0 0.0
    %192 = vmatprep.subr.mxu0 0.0
    %193 = vmatpush1.msra.mxu0 0.0
    %194 = vmatprep.subr.mxu0 0.0
    %195 = vmatpush1.msra.mxu0 0.0
    %196 = vmatprep.subr.mxu0 0.0
    %197 = vmatpush1.msra.mxu0 0.0
    %198 = vmatprep.subr.mxu0 0.0
    %199 = vmatpush1.msra.mxu0 0.0
    %200 = vmatprep.subr.mxu0 0.0
    %201 = vmatpush1.msra.mxu0 0.0
    %202 = vmatprep.subr.mxu0 0.0
    %203 = vmatpush1.msra.mxu0 0.0
    %204 = vmatprep.mubr.f32.mxu0 0.0
    %205 = vmatmul.mubr.f32.gmra.mrb[0].mxu0 %v135
    %v206 = vpop.f32.mrb[0].mxu0
    %v207 = vadd.f32 0.0, %v206
    %v208 = vpop.f32.mrb[0].mxu0
    %209 = vmatprep.mubr.f32.mxu0 0.0
    %210 = vmatmul.mubr.f32.gmra.mrb[0].mxu0 %v138
    %v211 = vpop.f32.mrb[0].mxu0
    %v212 = vadd.f32 0.0, %v211
    %v213 = vpop.f32.mrb[0].mxu0
    %214 = vdwg.mxu0
    %217 = vrot.lane.b32.xlu0 %v207, 32
    %v218 = vpop.permute.xlu0 %217
    %219 = vrot.lane.b32.xlu0 %v212, 32
    %v220 = vpop.permute.xlu0 %219
    %v223 = vadd.f32 %v118, %v218
    %v224 = vadd.f32 %v123, %v220
    %v225 = vtanh.pop %v223
    %v226 = vtanh.pop %v224
    %229 = vrot.lane.b32.xlu0 %v225, 96
    %v230 = vpop.permute.xlu0 %229
    %231 = vrot.lane.b32.xlu0 %v226, 96
    %v232 = vpop.permute.xlu0 %231
    %vm235 = vcmask 23552
    %236 = vst.msk [vmem:[%s4] sm:$0xff] %vm235, %v230
    %237 = vst.msk [vmem:[%s4 + $0x8] sm:$0xff] %vm235, %v232
    // Predicated region
    $region22: #{tpu_custom_call.1} parent=1 // pred_check
      _
    $region23: #{tpu_custom_call.1} parent=1 // pred_check_branch
      %239 = sbr.rel (0) target = $region25
    $region24: #{tpu_custom_call.1} parent=1 // pred_region
      _
    $region25: #{tpu_custom_call.1} parent=1 // pred_fallthru
      _
    // Predicated region
    $region26: #{tpu_custom_call.1} parent=1 // pred_check
      _
    $region27: #{tpu_custom_call.1} parent=1 // pred_check_branch
      %241 = sbr.rel (0) target = $region29
    $region28: #{tpu_custom_call.1} parent=1 // pred_region
      _
    $region29: #{tpu_custom_call.1} parent=1 // pred_fallthru
      _
    %242 = vsyncpa [#allocation3], 1

</llo_original>
